<compile_context>
chip_gen: v7x
topology: tpu7x:2x2x1
jax: 0.10.0
libtpu: 0.0.40
codegen_flags: <defaults>
</compile_context>

<pallas_src>
import jax
import jax.numpy as jnp
from jax.experimental import pallas as pl
from jax.experimental.pallas import tpu as pltpu

NUM_CLASSES = 10


def _parh_conv1x1_kernel(x_ref, w_ref, b_ref, o_ref):
    # x_ref : (Cin, TM)   bf16  -- channels on sublanes, pixels on lanes
    # w_ref : (Cout, Cin) bf16
    # b_ref : (Cout, 1)   f32
    # o_ref : (Cout, TM)  f32   -- lane-dense output tile
    y = jnp.dot(w_ref[...], x_ref[...], preferred_element_type=jnp.float32)
    o_ref[...] = (y + b_ref[...]).astype(o_ref.dtype)


def parh_forward(x_nchw, conv_w, conv_b, *, tile_m=128):
    """PARH forward: grad_reverse (identity in fwd) + 1x1 Conv2d(Cin -> NUM_CLASSES).

    x_nchw : (B, Cin, H, W) float32
    conv_w : (Cout, Cin, 1, 1) float32   (PyTorch Conv2d weight layout)
    conv_b : (Cout,) float32
    returns: (B, Cout, H, W) float32
    """
    B, Cin, H, W = x_nchw.shape
    Cout = conv_w.shape[0]
    HW = H * W

    # NCHW is already (batch, channel, pixel)-major: a free reshape gives
    # (B, Cin, HW) with the long pixel axis last -> lane dimension.
    x3 = x_nchw.reshape(B, Cin, HW)

    # Pad the pixel axis up to a multiple of the lane tile (no "TM = M" fallback).
    HWp = tile_m * pl.cdiv(HW, tile_m)
    if HWp != HW:
        x3 = jnp.pad(x3, ((0, 0), (0, 0), (0, HWp - HW)))

    # bf16 MXU inputs; f32 accumulation + epilogue.
    x3 = x3.astype(jnp.bfloat16)
    w2 = conv_w.reshape(Cout, Cin).astype(jnp.bfloat16)
    b2 = conv_b.reshape(Cout, 1).astype(jnp.float32)

    grid = (B, HWp // tile_m)

    out = pl.pallas_call(
        _parh_conv1x1_kernel,
        out_shape=jax.ShapeDtypeStruct((B, Cout, HWp), jnp.float32),
        grid_spec=pltpu.PrefetchScalarGridSpec(
            num_scalar_prefetch=0,
            grid=grid,
            in_specs=[
                # activation tile: batch squeezed, (Cin, TM) in the kernel
                pl.BlockSpec((None, Cin, tile_m), lambda bi, mi: (bi, 0, mi)),
                # grid-invariant weight / bias (tiny; full blocks)
                pl.BlockSpec((Cout, Cin), lambda bi, mi: (0, 0)),
                pl.BlockSpec((Cout, 1), lambda bi, mi: (0, 0)),
            ],
            out_specs=pl.BlockSpec((None, Cout, tile_m), lambda bi, mi: (bi, 0, mi)),
        ),
        compiler_params=pltpu.CompilerParams(
            dimension_semantics=("parallel", "parallel")),
    )(x3, w2, b2)

    if HWp != HW:
        out = out[:, :, :HW]
    return out.reshape(B, Cout, H, W)


if __name__ == "__main__":
    key = jax.random.PRNGKey(0)
    kx, kw, kb = jax.random.split(key, 3)

    # Small shapes consistent with the module: PARH(inchannel=16) on a 16x16 map.
    B, CIN, H, W = 2, 16, 16, 16
    x = jax.random.normal(kx, (B, CIN, H, W), jnp.float32)
    conv_w = 0.1 * jax.random.normal(kw, (NUM_CLASSES, CIN, 1, 1), jnp.float32)
    conv_b = 0.1 * jax.random.normal(kb, (NUM_CLASSES,), jnp.float32)

    fwd = jax.jit(parh_forward)
    y = fwd(x, conv_w, conv_b)
    jax.block_until_ready(y)
    assert y.shape == (B, NUM_CLASSES, H, W)

    # Sanity check against a plain-JAX reference (same bf16 input rounding,
    # f32 accumulation) -- grad_reverse is the identity in forward.
    xr = x.astype(jnp.bfloat16).astype(jnp.float32)
    wr = conv_w.reshape(NUM_CLASSES, CIN).astype(jnp.bfloat16).astype(jnp.float32)
    ref = jnp.einsum("oc,bchw->bohw", wr, xr) + conv_b.reshape(1, NUM_CLASSES, 1, 1)
    assert float(jnp.max(jnp.abs(y - ref))) < 1e-3

    print("KERNEL_OK")
</pallas_src>

<mosaic_0001>
module attributes {stable_mosaic.version = 11 : i64} {
  func.func @_parh_conv1x1_kernel(%arg0: i32, %arg1: i32, %arg2: memref<1x16x128xbf16, #tpu.memory_space<vmem>>, %arg3: memref<10x16xbf16, #tpu.memory_space<vmem>>, %arg4: memref<10x1xf32, #tpu.memory_space<vmem>>, %arg5: memref<1x10x128xf32, #tpu.memory_space<vmem>>) attributes {dimension_semantics = [#tpu.dimension_semantics<parallel>, #tpu.dimension_semantics<parallel>], iteration_bounds = array<i64: 2, 2>, scalar_prefetch = 0 : i64, scratch_operands = 0 : i64, tpu.core_type = #tpu.core_type<tc>, window_params = [{transform_indices = @transform_0, window_bounds = array<i64: 1, 16, 128>}, {pipeline_mode = #tpu.pipeline_mode<synchronous>, transform_indices = @transform_1, window_bounds = array<i64: 10, 16>}, {pipeline_mode = #tpu.pipeline_mode<synchronous>, transform_indices = @transform_2, window_bounds = array<i64: 10, 1>}, {transform_indices = @transform_3, window_bounds = array<i64: 1, 10, 128>}]} {
    %c0 = arith.constant 0 : index
    %c0_0 = arith.constant 0 : index
    %0 = vector.load %arg3[%c0, %c0_0] : memref<10x16xbf16, #tpu.memory_space<vmem>>, vector<10x16xbf16>
    %c0_1 = arith.constant 0 : index
    %c0_2 = arith.constant 0 : index
    %c0_3 = arith.constant 0 : index
    %1 = vector.load %arg2[%c0_1, %c0_2, %c0_3] : memref<1x16x128xbf16, #tpu.memory_space<vmem>>, vector<1x16x128xbf16>
    %2 = vector.shape_cast %1 : vector<1x16x128xbf16> to vector<16x128xbf16>
    %cst = arith.constant dense<0.000000e+00> : vector<10x128xf32>
    %3 = tpu.matmul %0, %2, %cst {dimension_numbers = #tpu.dot_dimension_numbers<[1], [0], [0], [1], [0, 0, 1, 1], [], []>} : vector<10x16xbf16>, vector<16x128xbf16>, vector<10x128xf32> -> vector<10x128xf32>
    %c0_4 = arith.constant 0 : index
    %c0_5 = arith.constant 0 : index
    %4 = vector.load %arg4[%c0_4, %c0_5] : memref<10x1xf32, #tpu.memory_space<vmem>>, vector<10x1xf32>
    %5 = vector.broadcast %4 : vector<10x1xf32> to vector<10x128xf32>
    %6 = arith.addf %3, %5 : vector<10x128xf32>
    %c0_6 = arith.constant 0 : index
    %c0_7 = arith.constant 0 : index
    %c0_8 = arith.constant 0 : index
    %7 = vector.load %arg5[%c0_6, %c0_7, %c0_8] : memref<1x10x128xf32, #tpu.memory_space<vmem>>, vector<1x10x128xf32>
    %8 = vector.shape_cast %7 : vector<1x10x128xf32> to vector<10x128xf32>
    %9 = vector.shape_cast %6 : vector<10x128xf32> to vector<1x10x128xf32>
    tpu.vector_store %arg5[%c0_6, %c0_7, %c0_8], %9 {strides = array<i32>} : memref<1x10x128xf32, #tpu.memory_space<vmem>>, vector<1x10x128xf32>,
    return
  }
  func.func @transform_0(%arg0: i32, %arg1: i32) -> (i32, i32, i32) {
    %c0_i32 = arith.constant 0 : i32
    %c0_i32_0 = arith.constant 0 : i32
    return %arg0, %c0_i32, %arg1 : i32, i32, i32
  }
  func.func @transform_1(%arg0: i32, %arg1: i32) -> (i32, i32) {
    %c0_i32 = arith.constant 0 : i32
    %c0_i32_0 = arith.constant 0 : i32
    %c0_i32_1 = arith.constant 0 : i32
    return %c0_i32, %c0_i32_0 : i32, i32
  }
  func.func @transform_2(%arg0: i32, %arg1: i32) -> (i32, i32) {
    %c0_i32 = arith.constant 0 : i32
    %c0_i32_0 = arith.constant 0 : i32
    %c0_i32_1 = arith.constant 0 : i32
    return %c0_i32, %c0_i32_0 : i32, i32
  }
  func.func @transform_3(%arg0: i32, %arg1: i32) -> (i32, i32, i32) {
    %c0_i32 = arith.constant 0 : i32
    %c0_i32_0 = arith.constant 0 : i32
    return %arg0, %c0_i32, %arg1 : i32, i32, i32
  }
}

</mosaic_0001>

<llo_original>
// kernel: parh_forward.1
$region0: #{parh_forward.1}
  #allocation0 [shape = 'u32[]', space=smem, size = 0x4, offset = 0x4, fixed_abs, tag = 'smem constant byte address 0x4 - core index']
  #allocation1 [shape = 'u32[144,128]{1,0:T(1,128)}', space=vmem, size = 0x12000, scoped, tag = 'internal scratch']
  %s0 = inlined_call_operand.vmem [shape: bf16[2,16,256], index: 0, kind: input, shape index: {}]
  %s1 = inlined_call_operand.vmem [shape: bf16[10,16], index: 1, kind: input, shape index: {}]
  %s2 = inlined_call_operand.vmem [shape: f32[10,1], index: 2, kind: input, shape index: {}]
  %s3 = inlined_call_operand.vmem [shape: f32[2,10,256], index: 3, kind: output, shape index: {}]
  %s4 = sld [smem:[#allocation0]]
  $region120: #{parh_forward.1} parent=0
    _
  %s6 = ssub.s32 1, %s4
  %s7 = scalar_select 0, %s6, %s4
  $region1: #{parh_forward.1} parent=0
    #allocation2 [shape = 'u8[8192]{0}', space=vmem, size = 0x2000, scoped, tag = 'input window, operand 0']
    #allocation3 [shape = 'u8[16384]{0}', space=vmem, size = 0x4000, scoped, tag = 'output window, operand 0']
    loop: start=0, step=1, limit=6
    $region2: #{parh_forward.1} parent=1 // loop_pre_header
      _
    $region3: #{parh_forward.1} parent=1 // loop_header
      %s9 = sphi 0, %s13
      %p10 = scmp.ge.s32.totalorder %s9, 6
      %s16 = sphi 0, %s28
      %s17 = sphi 0, %s24
      %s18 = sphi 0, %s16
      %s19 = sphi 0, %s17
      %s20 = sphi 0, %s18
      %s21 = sphi 0, %s19
      %s33 = sphi 0, %s35
      %s36 = sphi 0, %s33
      %s37 = sphi 0, %s36
      %s53 = sphi 0, %s37
      %s57 = sphi 0, %s57
      %s59 = sphi 0, %s57
      %s60 = sphi 0, %s59
      %s74 = sphi 0, %s60
      %s78 = sphi 0, %s78
      %s80 = sphi 0, %s78
      %s81 = sphi 0, %s80
      %s95 = sphi 0, %s81
      %s103 = sphi 0, %s105
      %s106 = sphi 0, %s103
      %s107 = sphi 0, %s106
      %s123 = sphi 0, %s107
    $region4: #{parh_forward.1} parent=1 // loop_header_branch
      %12 = sbr.rel (%p10) target = $region8
    $region5: #{parh_forward.1} parent=1 // loop_body
      %s14 = ssub.s32 %s9, 1
      %s15 = ssub.s32 %s9, 2
      %s22 = sadd.s32 1, %s17
      %p23 = scmp.ge.s32.totalorder %s22, 2
      %s24 = scalar_select %p23, 0, %s22
      %s25 = sadd.s32 1, %s16
      %s26 = scalar_select %p23, %s25, %s16
      %p27 = scmp.ge.s32.totalorder %s26, 2
      %s28 = scalar_select %p27, 0, %s26
      %s29 = ssub.s32 %s16, %s28
      %s30 = ssub.s32 %s17, %s24
      %s31 = sor.u32 %s29, %s30
      %p32 = scmp.eq.s32.totalorder %s31, 0
      %s34 = sadd.s32 %s33, 1
      %s35 = scalar_select %p32, %s33, %s34
      %p38 = pneg %p32
      %p39 = scmp.eq.s32.totalorder %s9, 3
      %p40 = por %p38, %p39
      %p41 = scmp.ne.s32.totalorder %s33, %s36
      %p42 = scmp.eq.s32.totalorder %s9, 0
      %p43 = por %p41, %p42
      %p44 = scmp.ne.s32.totalorder %s33, %s36
      %p45 = scmp.eq.s32.totalorder %s14, 3
      %p46 = por %p44, %p45
      %p47 = scmp.ne.s32.totalorder %s36, %s37
      %p48 = scmp.eq.s32.totalorder %s14, 0
      %p49 = por %p47, %p48
      %p50 = scmp.ne.s32.totalorder %s36, %s37
      %p51 = scmp.eq.s32.totalorder %s15, 3
      %p52 = por %p50, %p51
      %p54 = scmp.ne.s32.totalorder %s37, %s53
      %p55 = scmp.eq.s32.totalorder %s15, 0
      %p56 = por %p54, %p55
      %s58 = sadd.s32 %s57, 1
      %p61 = scmp.eq.s32.totalorder %s9, 3
      %p62 = scmp.ne.s32.totalorder %s57, %s59
      %p63 = scmp.eq.s32.totalorder %s9, 0
      %p64 = por %p62, %p63
      %p65 = scmp.ne.s32.totalorder %s57, %s59
      %p66 = scmp.eq.s32.totalorder %s14, 3
      %p67 = por %p65, %p66
      %p68 = scmp.ne.s32.totalorder %s59, %s60
      %p69 = scmp.eq.s32.totalorder %s14, 0
      %p70 = por %p68, %p69
      %p71 = scmp.ne.s32.totalorder %s59, %s60
      %p72 = scmp.eq.s32.totalorder %s15, 3
      %p73 = por %p71, %p72
      %p75 = scmp.ne.s32.totalorder %s60, %s74
      %p76 = scmp.eq.s32.totalorder %s15, 0
      %p77 = por %p75, %p76
      %s79 = sadd.s32 %s78, 1
      %p82 = scmp.eq.s32.totalorder %s9, 3
      %p83 = scmp.ne.s32.totalorder %s78, %s80
      %p84 = scmp.eq.s32.totalorder %s9, 0
      %p85 = por %p83, %p84
      %p86 = scmp.ne.s32.totalorder %s78, %s80
      %p87 = scmp.eq.s32.totalorder %s14, 3
      %p88 = por %p86, %p87
      %p89 = scmp.ne.s32.totalorder %s80, %s81
      %p90 = scmp.eq.s32.totalorder %s14, 0
      %p91 = por %p89, %p90
      %p92 = scmp.ne.s32.totalorder %s80, %s81
      %p93 = scmp.eq.s32.totalorder %s15, 3
      %p94 = por %p92, %p93
      %p96 = scmp.ne.s32.totalorder %s81, %s95
      %p97 = scmp.eq.s32.totalorder %s15, 0
      %p98 = por %p96, %p97
      %s99 = ssub.s32 %s16, %s28
      %s100 = ssub.s32 %s17, %s24
      %s101 = sor.u32 %s99, %s100
      %p102 = scmp.eq.s32.totalorder %s101, 0
      %s104 = sadd.s32 %s103, 1
      %s105 = scalar_select %p102, %s103, %s104
      %p108 = pneg %p102
      %p109 = scmp.eq.s32.totalorder %s9, 3
      %p110 = por %p108, %p109
      %p111 = scmp.ne.s32.totalorder %s103, %s106
      %p112 = scmp.eq.s32.totalorder %s9, 0
      %p113 = por %p111, %p112
      %p114 = scmp.ne.s32.totalorder %s103, %s106
      %p115 = scmp.eq.s32.totalorder %s14, 3
      %p116 = por %p114, %p115
      %p117 = scmp.ne.s32.totalorder %s106, %s107
      %p118 = scmp.eq.s32.totalorder %s14, 0
      %p119 = por %p117, %p118
      %p120 = scmp.ne.s32.totalorder %s106, %s107
      %p121 = scmp.eq.s32.totalorder %s15, 3
      %p122 = por %p120, %p121
      %p124 = scmp.ne.s32.totalorder %s107, %s123
      %p125 = scmp.eq.s32.totalorder %s15, 0
      %p126 = por %p124, %p125
      %p127 = scmp.le.s32.totalorder 1, %s9
      %p128 = scmp.lt.s32.totalorder %s9, 5
      %p129 = pnand %p127, %p128
      %p130 = pneg %p129
      // Predicated region
      $region9: #{parh_forward.1} parent=5 // pred_check
        _
      $region10: #{parh_forward.1} parent=5 // pred_check_branch
        %132 = sbr.rel (%p129) target = $region12
      $region11: #{parh_forward.1} parent=5 // pred_region
        %s133 = ssub.s32 %s9, 1
        // Predicated region
        $region13: #{parh_forward.1} parent=11 // pred_check
          %p134 = pneg %p70
        $region14: #{parh_forward.1} parent=11 // pred_check_branch
          %136 = sbr.rel (%p134) target = $region16
        $region15: #{parh_forward.1} parent=11 // pred_region
          _
        $region16: #{parh_forward.1} parent=11 // pred_fallthru
          _
        // Predicated region
        $region17: #{parh_forward.1} parent=11 // pred_check
          %p137 = pneg %p91
        $region18: #{parh_forward.1} parent=11 // pred_check_branch
          %139 = sbr.rel (%p137) target = $region20
        $region19: #{parh_forward.1} parent=11 // pred_region
          _
        $region20: #{parh_forward.1} parent=11 // pred_fallthru
          _
      $region12: #{parh_forward.1} parent=5 // pred_fallthru
        _
      %p140 = scmp.lt.s32.totalorder %s9, 4
      // Predicated region
      $region21: #{parh_forward.1} parent=5 // pred_check
        %p141 = pneg %p140
      $region22: #{parh_forward.1} parent=5 // pred_check_branch
        %143 = sbr.rel (%p141) target = $region24
      $region23: #{parh_forward.1} parent=5 // pred_region
        // Predicated region
        $region25: #{parh_forward.1} parent=23 // pred_check
          %p144 = pneg %p43
        $region26: #{parh_forward.1} parent=23 // pred_check_branch
          %146 = sbr.rel (%p144) target = $region28
        $region27: #{parh_forward.1} parent=23 // pred_region
          %s147 = sand.u32 %s33, 1
          %s148 = sand.u32 %s33, 1
          %s149 = smul.addr %s148, 8
          %s150 = scalar_lea.vmem [#allocation2], %s149
          %s151 = smul.addr %s16, 4
          %s152 = sadd.s32 %s17, %s151
          %s153 = smul.addr %s152, 4
          %s154 = scalar_lea.vmem %s0, %s153
          // Predicated region
          $region29: #{parh_forward.1} parent=27 // pred_check
            _
          $region30: #{parh_forward.1} parent=27 // pred_check_branch
            %156 = sbr.rel (0) target = $region32
          $region31: #{parh_forward.1} parent=27 // pred_region
            // Predicated region
            $region33: #{parh_forward.1} parent=31 // pred_check
              _
            $region34: #{parh_forward.1} parent=31 // pred_check_branch
              %158 = sbr.rel target = $region36
            $region35: #{parh_forward.1} parent=31 // pred_region
              // Predicated region
              $region48: #{parh_forward.1} parent=35 // pred_check
                _
              $region49: #{parh_forward.1} parent=35 // pred_check_branch
                %175 = sbr.rel (0) target = $region51
              $region50: #{parh_forward.1} parent=35 // pred_region
                loop: start=0, step=1, limit=1
                $region52: #{parh_forward.1} parent=50 // loop_pre_header
                  _
                $region53: #{parh_forward.1} parent=50 // loop_header
                  %s177 = sphi 0, %s181
                  %p178 = scmp.ge.s32.totalorder %s177, 1
                  %s182 = sphi %s154, %s154
                  %s183 = sphi %s150, %s150
                $region54: #{parh_forward.1} parent=50 // loop_header_branch
                  %180 = sbr.rel (%p178) target = $region58
                $region55: #{parh_forward.1} parent=50 // loop_body
                  _
                $region56: #{parh_forward.1} parent=50 // loop_footer
                  %s181 = sadd.s32 1, %s177
                $region57: #{parh_forward.1} parent=50 // loop_footer_branch
                  %176 = sbr.rel target = $region53
                $region58: #{parh_forward.1} parent=50 // loop_exit
                  _
                loop: start=0, step=1, limit=1
                $region59: #{parh_forward.1} parent=50 // loop_pre_header
                  _
                $region60: #{parh_forward.1} parent=50 // loop_header
                  %s186 = sphi 0, %s190
                  %p187 = scmp.ge.s32.totalorder %s186, 1
                  %s191 = sphi %s154, %s154
                  %s192 = sphi %s150, %s150
                $region61: #{parh_forward.1} parent=50 // loop_header_branch
                  %189 = sbr.rel (%p187) target = $region65
                $region62: #{parh_forward.1} parent=50 // loop_body
                  %v193 = vld [vmem:[%s191] sm:$0xf]
                  %194 = vst [vmem:[%s192] sm:$0xf] %v193
                  %v195 = vld [vmem:[%s191 + $0x8] sm:$0xf]
                  %196 = vst [vmem:[%s192 + $0x4] sm:$0xf] %v195
                $region63: #{parh_forward.1} parent=50 // loop_footer
                  %s190 = sadd.s32 1, %s186
                $region64: #{parh_forward.1} parent=50 // loop_footer_branch
                  %185 = sbr.rel target = $region60
                $region65: #{parh_forward.1} parent=50 // loop_exit
                  _
              $region51: #{parh_forward.1} parent=35 // pred_fallthru
                _
            $region36: #{parh_forward.1} parent=31 // pred_fallthru
              _
            // Predicated region
            $region37: #{parh_forward.1} parent=31 // pred_check
              _
            $region38: #{parh_forward.1} parent=31 // pred_check_branch
              %160 = sbr.rel (0) target = $region40
            $region39: #{parh_forward.1} parent=31 // pred_region
              loop: start=0, step=1, limit=1
              $region41: #{parh_forward.1} parent=39 // loop_pre_header
                _
              $region42: #{parh_forward.1} parent=39 // loop_header
                %s163 = sphi 0, %s167
                %p164 = scmp.ge.s32.totalorder %s163, 1
                %s168 = sphi %s154, %s154
                %s169 = sphi %s150, %s150
              $region43: #{parh_forward.1} parent=39 // loop_header_branch
                %166 = sbr.rel (%p164) target = $region47
              $region44: #{parh_forward.1} parent=39 // loop_body
                %v170 = vld [vmem:[%s168] sm:$0xf]
                %171 = vst [vmem:[%s169] sm:$0xf] %v170
                %v172 = vld [vmem:[%s168 + $0x8] sm:$0xf]
                %173 = vst [vmem:[%s169 + $0x4] sm:$0xf] %v172
              $region45: #{parh_forward.1} parent=39 // loop_footer
                %s167 = sadd.s32 1, %s163
              $region46: #{parh_forward.1} parent=39 // loop_footer_branch
                %162 = sbr.rel target = $region42
              $region47: #{parh_forward.1} parent=39 // loop_exit
                _
            $region40: #{parh_forward.1} parent=31 // pred_fallthru
              _
          $region32: #{parh_forward.1} parent=27 // pred_fallthru
            _
          %197 = vnop
        $region28: #{parh_forward.1} parent=23 // pred_fallthru
          _
      $region24: #{parh_forward.1} parent=5 // pred_fallthru
        _
      %p198 = scmp.le.s32.totalorder 1, %s9
      %p199 = scmp.lt.s32.totalorder %s9, 5
      %p200 = pnand %p198, %p199
      %p201 = pneg %p200
      // Predicated region
      $region66: #{parh_forward.1} parent=5 // pred_check
        _
      $region67: #{parh_forward.1} parent=5 // pred_check_branch
        %203 = sbr.rel (%p200) target = $region69
      $region68: #{parh_forward.1} parent=5 // pred_region
        %s204 = ssub.s32 %s9, 1
        %s205 = sand.u32 %s36, 1
        %s206 = sand.u32 %s36, 1
        %s207 = smul.addr %s206, 8
        %s208 = scalar_lea.vmem [#allocation2], %s207
        // Predicated region
        $region70: #{parh_forward.1} parent=68 // pred_check
          %p209 = pneg %p49
        $region71: #{parh_forward.1} parent=68 // pred_check_branch
          %211 = sbr.rel (%p209) target = $region73
        $region72: #{parh_forward.1} parent=68 // pred_region
          _
        $region73: #{parh_forward.1} parent=68 // pred_fallthru
          _
        %s212 = sand.u32 %s36, 1
        %s213 = sand.u32 %s36, 1
        %s214 = smul.addr %s213, 8
        %s215 = scalar_lea.vmem [#allocation2], %s214
        %p216 = pneg %p49
        %p217 = pneg %p46
        %p218 = pneg %p70
        %p219 = pneg %p67
        %p220 = pneg %p91
        %p221 = pneg %p88
        %p222 = pneg %p119
        %p223 = pneg %p116
        %s224 = sand.u32 %s106, 1
        %s225 = sand.u32 %s106, 1
        %s226 = smul.addr %s225, 16
        %s227 = scalar_lea.vmem [#allocation3], %s226
        %v229 = vld [vmem:[%s1] sm:$0xf]
        %v230 = vld [vmem:[%s1 + $0x4] sm:$0x1]
        %v231 = vld [vmem:[%s208] sm:$0xf]
        %v232 = vld [vmem:[%s208 + $0x4] sm:$0xf]
        %v233 = vld [vmem:[%s2] sm:$0xff]
        %v234 = vld [vmem:[%s2 + $0x8] sm:$0x3]
        %236 = vset.pattern.permute.xlu0 0
        %237 = vperm.xlu0 %236, %v233
        %v238 = vpop.permute.xlu0 %237
        %241 = vset.pattern.permute.xlu0 0
        %242 = vperm.xlu0 %241, %v234
        %v243 = vpop.permute.xlu0 %242
        %v247 = vunpack.c.l.b16 %v229
        %v248 = vunpack.c.l.b16 %v230
        %v249 = vpack.c.b16 %v248, %v247
        %v252 = vunpack.c.l.b16 %v231
        %v253 = vunpack.c.l.b16 %v232
        %v254 = vpack.c.b16 %v253, %v252
        %vm256 = vcmask 130048
        %v258 = vsel %vm256, %v249, 0
        %260 = vmatprep.subr.bf16.mxu0 0
        %261 = vmatpush1.bf16.msra.mxu0 %v254
        %262 = vmatprep.subr.bf16.mxu0 0
        %263 = vmatpush1.bf16.msra.mxu0 0
        %264 = vmatprep.subr.bf16.mxu0 0
        %265 = vmatpush1.bf16.msra.mxu0 0
        %266 = vmatprep.subr.bf16.mxu0 0
        %267 = vmatpush1.bf16.msra.mxu0 0
        %268 = vmatprep.subr.bf16.mxu0 0
        %269 = vmatpush1.bf16.msra.mxu0 0
        %270 = vmatprep.subr.bf16.mxu0 0
        %271 = vmatpush1.bf16.msra.mxu0 0
        %272 = vmatprep.subr.bf16.mxu0 0
        %273 = vmatpush1.bf16.msra.mxu0 0
        %274 = vmatprep.subr.bf16.mxu0 0
        %275 = vmatpush1.bf16.msra.mxu0 0
        %276 = vmatprep.subr.bf16.mxu0 0
        %277 = vmatpush1.bf16.msra.mxu0 0
        %278 = vmatprep.subr.bf16.mxu0 0
        %279 = vmatpush1.bf16.msra.mxu0 0
        %280 = vmatprep.subr.bf16.mxu0 0
        %281 = vmatpush1.bf16.msra.mxu0 0
        %282 = vmatprep.subr.bf16.mxu0 0
        %283 = vmatpush1.bf16.msra.mxu0 0
        %284 = vmatprep.subr.bf16.mxu0 0
        %285 = vmatpush1.bf16.msra.mxu0 0
        %286 = vmatprep.subr.bf16.mxu0 0
        %287 = vmatpush1.bf16.msra.mxu0 0
        %288 = vmatprep.subr.bf16.mxu0 0
        %289 = vmatpush1.bf16.msra.mxu0 0
        %290 = vmatprep.subr.bf16.mxu0 0
        %291 = vmatpush1.bf16.msra.mxu0 0
        %292 = vmatprep.mubr.bf16.mxu0 0
        %293 = vmatmul.mubr.bf16.gmra.mrb[0].mxu0 %v258
        %v294 = vpop.f32.mrb[0].mxu0
        %v295 = vadd.f32 %v238, %v294
        %v296 = vpop.f32.mrb[0].mxu0
        %v297 = vpop.f32.mrb[0].mxu0
        %v298 = vadd.f32 %v243, %v297
        %v299 = vpop.f32.mrb[0].mxu0
        %300 = vdwg.mxu0
        %301 = vst [vmem:[%s227] sm:$0xff] %v295
        %302 = vst [vmem:[%s227 + $0x8] sm:$0x3] %v298
        %s303 = sand.u32 %s106, 1
        %s304 = sand.u32 %s106, 1
        %s305 = smul.addr %s304, 16
        %s306 = scalar_lea.vmem [#allocation3], %s305
        // Predicated region
        $region74: #{parh_forward.1} parent=68 // pred_check
          %p307 = pneg %p116
        $region75: #{parh_forward.1} parent=68 // pred_check_branch
          %309 = sbr.rel (%p307) target = $region77
        $region76: #{parh_forward.1} parent=68 // pred_region
          %s310 = smul.addr %s18, 4
          %s311 = sadd.s32 %s19, %s310
          %s312 = smul.addr %s311, 8
          %s313 = scalar_lea.vmem %s3, %s312
          // Predicated region
          $region78: #{parh_forward.1} parent=76 // pred_check
            _
          $region79: #{parh_forward.1} parent=76 // pred_check_branch
            %315 = sbr.rel (0) target = $region81
          $region80: #{parh_forward.1} parent=76 // pred_region
            // Predicated region
            $region82: #{parh_forward.1} parent=80 // pred_check
              _
            $region83: #{parh_forward.1} parent=80 // pred_check_branch
              %317 = sbr.rel (0) target = $region85
            $region84: #{parh_forward.1} parent=80 // pred_region
              // Predicated region
              $region97: #{parh_forward.1} parent=84 // pred_check
                _
              $region98: #{parh_forward.1} parent=84 // pred_check_branch
                %334 = sbr.rel (0) target = $region100
              $region99: #{parh_forward.1} parent=84 // pred_region
                loop: start=0, step=1, limit=1
                $region101: #{parh_forward.1} parent=99 // loop_pre_header
                  _
                $region102: #{parh_forward.1} parent=99 // loop_header
                  %s336 = sphi 0, %s340
                  %p337 = scmp.ge.s32.totalorder %s336, 1
                  %s341 = sphi %s306, %s306
                  %s342 = sphi %s313, %s313
                $region103: #{parh_forward.1} parent=99 // loop_header_branch
                  %339 = sbr.rel (%p337) target = $region107
                $region104: #{parh_forward.1} parent=99 // loop_body
                  %v343 = vld [vmem:[%s341] sm:$0xff]
                  %344 = vst [vmem:[%s342] sm:$0xff] %v343
                  %v345 = vld [vmem:[%s341 + $0x8] sm:$0xff]
                  %346 = vst [vmem:[%s342 + $0x10] sm:$0xff] %v345
                $region105: #{parh_forward.1} parent=99 // loop_footer
                  %s340 = sadd.s32 1, %s336
                $region106: #{parh_forward.1} parent=99 // loop_footer_branch
                  %335 = sbr.rel target = $region102
                $region107: #{parh_forward.1} parent=99 // loop_exit
                  _
              $region100: #{parh_forward.1} parent=84 // pred_fallthru
                _
              // Predicated region
              $region108: #{parh_forward.1} parent=84 // pred_check
                _
              $region109: #{parh_forward.1} parent=84 // pred_check_branch
                %348 = sbr.rel target = $region111
              $region110: #{parh_forward.1} parent=84 // pred_region
                _
              $region111: #{parh_forward.1} parent=84 // pred_fallthru
                _
            $region85: #{parh_forward.1} parent=80 // pred_fallthru
              _
            // Predicated region
            $region86: #{parh_forward.1} parent=80 // pred_check
              _
            $region87: #{parh_forward.1} parent=80 // pred_check_branch
              %319 = sbr.rel target = $region89
            $region88: #{parh_forward.1} parent=80 // pred_region
              loop: start=0, step=1, limit=1
              $region90: #{parh_forward.1} parent=88 // loop_pre_header
                _
              $region91: #{parh_forward.1} parent=88 // loop_header
                %s322 = sphi 0, %s326
                %p323 = scmp.ge.s32.totalorder %s322, 1
                %s327 = sphi %s306, %s306
                %s328 = sphi %s313, %s313
              $region92: #{parh_forward.1} parent=88 // loop_header_branch
                %325 = sbr.rel (%p323) target = $region96
              $region93: #{parh_forward.1} parent=88 // loop_body
                %v329 = vld [vmem:[%s327] sm:$0xff]
                %330 = vst [vmem:[%s328] sm:$0xff] %v329
                %v331 = vld [vmem:[%s327 + $0x8] sm:$0xff]
                %332 = vst [vmem:[%s328 + $0x10] sm:$0xff] %v331
              $region94: #{parh_forward.1} parent=88 // loop_footer
                %s326 = sadd.s32 1, %s322
              $region95: #{parh_forward.1} parent=88 // loop_footer_branch
                %321 = sbr.rel target = $region91
              $region96: #{parh_forward.1} parent=88 // loop_exit
                _
            $region89: #{parh_forward.1} parent=80 // pred_fallthru
              _
          $region81: #{parh_forward.1} parent=76 // pred_fallthru
            _
          %349 = vnop
        $region77: #{parh_forward.1} parent=68 // pred_fallthru
          _
      $region69: #{parh_forward.1} parent=5 // pred_fallthru
        _
      %p350 = scmp.le.s32.totalorder 2, %s9
      // Predicated region
      $region112: #{parh_forward.1} parent=5 // pred_check
        %p351 = pneg %p350
      $region113: #{parh_forward.1} parent=5 // pred_check_branch
        %353 = sbr.rel (%p351) target = $region115
      $region114: #{parh_forward.1} parent=5 // pred_region
        %s354 = ssub.s32 %s9, 2
        // Predicated region
        $region116: #{parh_forward.1} parent=114 // pred_check
          %p355 = pneg %p122
        $region117: #{parh_forward.1} parent=114 // pred_check_branch
          %357 = sbr.rel (%p355) target = $region119
        $region118: #{parh_forward.1} parent=114 // pred_region
          %s358 = sand.u32 %s107, 1
          %s359 = sand.u32 %s107, 1
          %s360 = smul.addr %s359, 16
          %s361 = scalar_lea.vmem [#allocation3], %s360
        $region119: #{parh_forward.1} parent=114 // pred_fallthru
          _
      $region115: #{parh_forward.1} parent=5 // pred_fallthru
        _
    $region6: #{parh_forward.1} parent=1 // loop_footer
      %s13 = sadd.s32 1, %s9
    $region7: #{parh_forward.1} parent=1 // loop_footer_branch
      %8 = sbr.rel target = $region3
    $region8: #{parh_forward.1} parent=1 // loop_exit
      _

</llo_original>
